<compile_context>
chip_gen: v7x
topology: tpu7x:2x2x1
jax: 0.10.0
libtpu: 0.0.40
codegen_flags: <defaults>
</compile_context>

<pallas_src>
import functools

import jax
import jax.numpy as jnp
from jax.experimental import pallas as pl
from jax.experimental.pallas import tpu as pltpu


def _round_up(x, m):
    return ((x + m - 1) // m) * m


def _vmem_budgets():
    """(vmem_limit_bytes, target_block_f32_bytes), scaled to physical VMEM.

    The per-block *f32 working set* target is ~1/16 of physical VMEM: the kernel
    working set is roughly (2 double-buffered inputs + 2 double-buffered outputs)
    x block_bytes plus ~3 block-sized f32 temporaries (astype copy, centered xc,
    result), i.e. <= ~7x the f32 target -> <= ~44% of physical VMEM. v5e/v6e
    (128 MiB) get ~8 MiB blocks; v7x (64 MiB) stays at ~4 MiB with headroom.
    """
    cap = 64 * 1024 * 1024  # conservative fallback (v7x-sized)
    try:
        cap = int(pltpu.get_tpu_info().vmem_capacity_bytes)
    except Exception:
        pass
    limit = min(max(cap * 5 // 8, 32 * 1024 * 1024), 80 * 1024 * 1024)
    target = min(max(cap // 16, 2 * 1024 * 1024), 8 * 1024 * 1024)
    return limit, target


_VMEM_LIMIT_BYTES, _TARGET_BLOCK_F32_BYTES = _vmem_budgets()


def _row_align(dtype):
    # 8 rows for 4-byte dtypes, 16 for bf16, 32 for int8/fp8 (packed sublanes).
    return max(8, 32 // jnp.dtype(dtype).itemsize)


def _pick_tile(extent, align, unit_f32_bytes, max_tile=16384, other_steps=1,
               min_steps=4):
    """Largest align-multiple tile whose f32 working-set stays under budget.

    Also prefers >= min_steps total grid steps (2 per v7x TensorCore) so both
    cores get work and each keeps DMA double-buffering.
    """
    t = max(align, (_TARGET_BLOCK_F32_BYTES // max(unit_f32_bytes, 1)) // align * align)
    t = min(t, max_tile, _round_up(extent, align))
    if extent > align:
        while t > align and other_steps * pl.cdiv(extent, t) < min_steps:
            nt = max(align, _round_up(pl.cdiv(t, 2), align))
            if nt == t:
                break
            t = nt
    return t


# ---------------------------------------------------------------------------
# channels_last kernels
#
# Padded-tail-block invariant (do not break): reductions only run along the
# untiled axis (lanes for channels_last, the C axis for channels_first), so OOB
# garbage in a padded tail block only ever pollutes outputs that Pallas drops.
# ---------------------------------------------------------------------------
def _ln_lane_kernel(x_ref, wb_ref, o_ref, *, inv_c, eps):
    """Normalize (tile_r, C) over the last (lane) axis. Centered two-pass var."""
    x = x_ref[...].astype(jnp.float32)                       # (tr, C)
    mean = jnp.sum(x, axis=-1, keepdims=True) * inv_c
    xc = x - mean
    var = jnp.sum(xc * xc, axis=-1, keepdims=True) * inv_c   # centered: no cancellation
    inv = jax.lax.rsqrt(var + eps)
    w = wb_ref[0:1, :]                                       # (1, C) f32
    b = wb_ref[1:2, :]
    o_ref[...] = (xc * inv * w + b).astype(o_ref.dtype)


def _ln_folded_lane_kernel(x_ref, segm_ref, wb_ref, o_ref, *, eps):
    """channels_last, 128 % C == 0: k = 128//C rows share the lane axis.

    segm_ref is a (128,128) block-diagonal matrix whose CxC blocks are filled
    with 1/C (exact in bf16/f32 since C is a power of two). One MXU matmul at
    HIGHEST precision therefore yields the per-segment mean already broadcast
    across its C lanes, and a second the per-segment variance — lane-dense
    end-to-end (no masked vst, no relayouts) and no full-width *1/C VPU
    multiplies.
    """
    x = x_ref[...].astype(jnp.float32)                       # (tr, 128)
    a = segm_ref[...]                                        # (128, 128), values 0 or 1/C
    mean = jnp.dot(x, a, precision=jax.lax.Precision.HIGHEST,
                   preferred_element_type=jnp.float32)
    xc = x - mean
    var = jnp.dot(xc * xc, a, precision=jax.lax.Precision.HIGHEST,
                  preferred_element_type=jnp.float32)
    inv = jax.lax.rsqrt(var + eps)
    w = wb_ref[0:1, :]                                       # (1, 128) tiled weight
    b = wb_ref[1:2, :]
    o_ref[...] = (xc * inv * w + b).astype(o_ref.dtype)


def _layer_norm_lane(x2, w32, b32, eps, C):
    """General channels_last path: reduce over the lane axis."""
    R = x2.shape[0]
    align = _row_align(x2.dtype)
    wb = jnp.stack([w32, b32])                                # (2, C)
    tile_r = _pick_tile(R, align, C * 4)
    return pl.pallas_call(
        functools.partial(_ln_lane_kernel, inv_c=1.0 / C, eps=eps),
        out_shape=jax.ShapeDtypeStruct((R, C), x2.dtype),
        grid_spec=pltpu.PrefetchScalarGridSpec(
            num_scalar_prefetch=0,
            grid=(pl.cdiv(R, tile_r),),
            in_specs=[
                pl.BlockSpec((tile_r, C), lambda i: (i, 0)),
                pl.BlockSpec((2, C), lambda i: (0, 0)),
            ],
            out_specs=pl.BlockSpec((tile_r, C), lambda i: (i, 0)),
        ),
        compiler_params=pltpu.CompilerParams(
            dimension_semantics=("parallel",),
            vmem_limit_bytes=_VMEM_LIMIT_BYTES),
    )(x2, wb)


def _layer_norm_folded(x2, w32, b32, eps, C, k):
    """Lane-dense folded path. Requires x2.shape[0] % k == 0."""
    R = x2.shape[0]
    L = k * C                                                 # == 128
    Rf = R // k
    xf = x2.reshape(Rf, L)                                    # free row-major reshape
    # Block-diagonal segment-mean matrix (exact: 1/C is a power of two).
    segm = jnp.kron(jnp.eye(k, dtype=jnp.float32),
                    jnp.full((C, C), 1.0 / C, dtype=jnp.float32))     # (L, L)
    wb = jnp.stack([jnp.tile(w32, k), jnp.tile(b32, k)])      # (2, L)
    align = _row_align(x2.dtype)
    tile_r = _pick_tile(Rf, align, L * 4)
    out = pl.pallas_call(
        functools.partial(_ln_folded_lane_kernel, eps=eps),
        out_shape=jax.ShapeDtypeStruct((Rf, L), x2.dtype),
        grid_spec=pltpu.PrefetchScalarGridSpec(
            num_scalar_prefetch=0,
            grid=(pl.cdiv(Rf, tile_r),),
            in_specs=[
                pl.BlockSpec((tile_r, L), lambda i: (i, 0)),
                pl.BlockSpec((L, L), lambda i: (0, 0)),
                pl.BlockSpec((2, L), lambda i: (0, 0)),
            ],
            out_specs=pl.BlockSpec((tile_r, L), lambda i: (i, 0)),
        ),
        compiler_params=pltpu.CompilerParams(
            dimension_semantics=("parallel",),
            vmem_limit_bytes=_VMEM_LIMIT_BYTES),
    )(xf, segm, wb)
    return out.reshape(R, C)


def layer_norm_channels_last(x, weight, bias, eps=1e-6):
    """x: (..., C); F.layer_norm over the last dim. Returns same shape/dtype."""
    orig_shape = x.shape
    C = orig_shape[-1]
    x2 = x.reshape(-1, C)
    R = x2.shape[0]
    w32 = weight.astype(jnp.float32).reshape(-1)
    b32 = bias.astype(jnp.float32).reshape(-1)

    # Lane-dense fold when C divides 128; rows not divisible by k are peeled
    # into the general kernel instead of abandoning the fold.
    # TODO(synk): C values like 48/96/192 (128 % C != 0) stay on the general
    # (partially lane-masked) path — an lcm-based fold there costs more MXU
    # (K grows to 384 at HIGHEST precision) than the masked stores it removes.
    k = 128 // C if (C < 128 and 128 % C == 0) else 1
    if k > 1 and R >= k:
        Rm = (R // k) * k
        main = _layer_norm_folded(x2[:Rm], w32, b32, eps, C, k)
        if Rm < R:
            tail = _layer_norm_lane(x2[Rm:], w32, b32, eps, C)   # < k rows
            out2 = jnp.concatenate([main, tail], axis=0)
        else:
            out2 = main
    else:
        out2 = _layer_norm_lane(x2, w32, b32, eps, C)
    return out2.reshape(orig_shape)


# ---------------------------------------------------------------------------
# channels_first kernel: x block (n_tile, C, hw_tile), normalize over channels
# ---------------------------------------------------------------------------
def _ln_sublane_kernel(x_ref, wb_ref, o_ref, *, inv_c, eps):
    x = x_ref[...].astype(jnp.float32)                        # (nt, C, hw)
    mean = jnp.sum(x, axis=1, keepdims=True) * inv_c          # (nt, 1, hw)
    xc = x - mean
    var = jnp.sum(xc * xc, axis=1, keepdims=True) * inv_c     # centered variance
    inv = jax.lax.rsqrt(var + eps)
    w = wb_ref[:, 0:1]                                        # (C, 1)
    b = wb_ref[:, 1:2]
    o_ref[...] = (xc * inv * w[None] + b[None]).astype(o_ref.dtype)


def layer_norm_channels_first(x, weight, bias, eps=1e-6):
    """x: (N, C, H, W); normalize over the channel dim. Returns same shape/dtype."""
    N, C, H, W = x.shape
    HW = H * W
    x3 = x.reshape(N, C, HW)

    if HW >= 128:
        hw_tile = _pick_tile(HW, 128, C * 4, other_steps=N)
        n_tile = 1
    else:
        # Tiny-spatial stage (e.g. 7x7): lane axis is HW-padded (documented
        # cost); fold several images per block so the grid does not collapse to
        # single steps and the ~0.35 us/step overhead is amortized.
        hw_tile = HW                                          # full extent (allowed)
        per_n_f32 = C * HW * 4
        n_tile = max(1, min(N, _TARGET_BLOCK_F32_BYTES // max(per_n_f32, 1)))
        while n_tile > 1 and pl.cdiv(N, n_tile) < 4:
            n_tile = max(1, (n_tile + 1) // 2)
        # TODO(synk): C below the sublane pack and HW < 128 still waste padded
        # sublanes/lanes; a wrapper-side transpose to (C, N*HW) would fix it at
        # the cost of an extra HBM pass.

    wb = jnp.stack([weight.astype(jnp.float32).reshape(-1),
                    bias.astype(jnp.float32).reshape(-1)], axis=-1)   # (C, 2)

    out = pl.pallas_call(
        functools.partial(_ln_sublane_kernel, inv_c=1.0 / C, eps=eps),
        out_shape=jax.ShapeDtypeStruct((N, C, HW), x.dtype),
        grid_spec=pltpu.PrefetchScalarGridSpec(
            num_scalar_prefetch=0,
            grid=(pl.cdiv(N, n_tile), pl.cdiv(HW, hw_tile)),
            in_specs=[
                pl.BlockSpec((n_tile, C, hw_tile), lambda n, s: (n, 0, s)),
                pl.BlockSpec((C, 2), lambda n, s: (0, 0)),
            ],
            out_specs=pl.BlockSpec((n_tile, C, hw_tile), lambda n, s: (n, 0, s)),
        ),
        compiler_params=pltpu.CompilerParams(
            dimension_semantics=("parallel", "parallel"),
            vmem_limit_bytes=_VMEM_LIMIT_BYTES),
    )(x3, wb)
    return out.reshape(N, C, H, W)


# ---------------------------------------------------------------------------
# pure-JAX references
# ---------------------------------------------------------------------------
def _ref_channels_last(x, w, b, eps):
    xf = x.astype(jnp.float32)
    mean = jnp.mean(xf, axis=-1, keepdims=True)
    var = jnp.mean((xf - mean) ** 2, axis=-1, keepdims=True)
    return (((xf - mean) / jnp.sqrt(var + eps)) * w + b).astype(x.dtype)


def _ref_channels_first(x, w, b, eps):
    xf = x.astype(jnp.float32)
    u = jnp.mean(xf, axis=1, keepdims=True)
    s = jnp.mean((xf - u) ** 2, axis=1, keepdims=True)
    xn = (xf - u) / jnp.sqrt(s + eps)
    return (w[None, :, None, None].astype(jnp.float32) * xn
            + b[None, :, None, None].astype(jnp.float32)).astype(x.dtype)


if __name__ == "__main__":
    eps = 1e-6
    key = jax.random.PRNGKey(0)
    k1, k2, k3, k4, k5 = jax.random.split(key, 5)

    # ----- channels_first: NCHW input (ConvNeXt downsample-layer usage) -----
    N, C, H, W = 2, 4, 16, 16
    x_cf = jax.random.normal(k1, (N, C, H, W), dtype=jnp.float32)
    w_cf = jax.random.normal(k2, (C,), dtype=jnp.float32) * 0.1 + 1.0
    b_cf = jax.random.normal(k3, (C,), dtype=jnp.float32) * 0.1

    out_cf = layer_norm_channels_first(x_cf, w_cf, b_cf, eps)
    jax.block_until_ready(out_cf)
    ref_cf = _ref_channels_first(x_cf, w_cf, b_cf, eps)
    assert out_cf.shape == x_cf.shape and out_cf.dtype == x_cf.dtype
    assert jnp.allclose(out_cf, ref_cf, atol=1e-5, rtol=1e-5), "channels_first mismatch"

    # ----- channels_last, small C -> lane-dense folded path -----
    Cl = 32
    x_cl = jax.random.normal(k4, (2, 8, 8, Cl), dtype=jnp.float32)
    w_cl = jnp.linspace(0.5, 1.5, Cl, dtype=jnp.float32)
    b_cl = jnp.linspace(-0.2, 0.2, Cl, dtype=jnp.float32)

    out_cl = layer_norm_channels_last(x_cl, w_cl, b_cl, eps)
    jax.block_until_ready(out_cl)
    ref_cl = _ref_channels_last(x_cl, w_cl, b_cl, eps)
    assert out_cl.shape == x_cl.shape and out_cl.dtype == x_cl.dtype
    assert jnp.allclose(out_cl, ref_cl, atol=1e-5, rtol=1e-5), "channels_last mismatch"

    # ----- channels_last, small C with ragged rows -> folded path + peeled tail -----
    x_pe = jax.random.normal(k5, (3, 7, Cl), dtype=jnp.float32)   # R=21, k=4 -> tail of 1
    out_pe = layer_norm_channels_last(x_pe, w_cl, b_cl, eps)
    jax.block_until_ready(out_pe)
    ref_pe = _ref_channels_last(x_pe, w_cl, b_cl, eps)
    assert jnp.allclose(out_pe, ref_pe, atol=1e-5, rtol=1e-5), "peeled-tail mismatch"

    # ----- channels_last general path (C not dividing 128, ragged rows) -----
    Cg = 192
    x_g = jax.random.normal(k1, (3, 7, Cg), dtype=jnp.float32)
    w_g = jnp.linspace(0.8, 1.2, Cg, dtype=jnp.float32)
    b_g = jnp.linspace(-0.1, 0.1, Cg, dtype=jnp.float32)
    out_g = layer_norm_channels_last(x_g, w_g, b_g, eps)
    jax.block_until_ready(out_g)
    ref_g = _ref_channels_last(x_g, w_g, b_g, eps)
    assert jnp.allclose(out_g, ref_g, atol=1e-5, rtol=1e-5), "channels_last general mismatch"

    # ----- bf16 channels_last (exercises bf16 row alignment + f32 stats) -----
    x_bf = jax.random.normal(k2, (2, 8, 8, Cl), dtype=jnp.bfloat16)
    out_bf = layer_norm_channels_last(x_bf, w_cl, b_cl, eps)
    jax.block_until_ready(out_bf)
    ref_bf = _ref_channels_last(x_bf, w_cl, b_cl, eps)
    assert out_bf.dtype == jnp.bfloat16
    assert jnp.allclose(out_bf.astype(jnp.float32), ref_bf.astype(jnp.float32),
                        atol=2e-2, rtol=2e-2), "bf16 channels_last mismatch"

    print("KERNEL_OK")
</pallas_src>

<mosaic_0001>
module attributes {stable_mosaic.version = 11 : i64} {
  func.func @_ln_sublane_kernel(%arg0: i32, %arg1: i32, %arg2: memref<1x4x128xf32, #tpu.memory_space<vmem>>, %arg3: memref<4x2xf32, #tpu.memory_space<vmem>>, %arg4: memref<1x4x128xf32, #tpu.memory_space<vmem>>) attributes {dimension_semantics = [#tpu.dimension_semantics<parallel>, #tpu.dimension_semantics<parallel>], iteration_bounds = array<i64: 2, 2>, scalar_prefetch = 0 : i64, scratch_operands = 0 : i64, tpu.core_type = #tpu.core_type<tc>, window_params = [{transform_indices = @transform_0, window_bounds = array<i64: 1, 4, 128>}, {pipeline_mode = #tpu.pipeline_mode<synchronous>, transform_indices = @transform_1, window_bounds = array<i64: 4, 2>}, {transform_indices = @transform_2, window_bounds = array<i64: 1, 4, 128>}]} {
    %c0 = arith.constant 0 : index
    %c0_0 = arith.constant 0 : index
    %c0_1 = arith.constant 0 : index
    %0 = vector.load %arg2[%c0, %c0_0, %c0_1] : memref<1x4x128xf32, #tpu.memory_space<vmem>>, vector<1x4x128xf32>
    %cst = arith.constant dense<0.000000e+00> : vector<1x128xf32>
    %1 = vector.multi_reduction <add>, %0, %cst [1] : vector<1x4x128xf32> to vector<1x128xf32>
    %2 = vector.shape_cast %1 : vector<1x128xf32> to vector<1x1x128xf32>
    %cst_2 = arith.constant 2.500000e-01 : f32
    %3 = vector.broadcast %cst_2 : f32 to vector<1x1x128xf32>
    %4 = arith.mulf %2, %3 : vector<1x1x128xf32>
    %5 = vector.broadcast %4 : vector<1x1x128xf32> to vector<1x4x128xf32>
    %6 = arith.subf %0, %5 : vector<1x4x128xf32>
    %7 = arith.mulf %6, %6 : vector<1x4x128xf32>
    %cst_3 = arith.constant dense<0.000000e+00> : vector<1x128xf32>
    %8 = vector.multi_reduction <add>, %7, %cst_3 [1] : vector<1x4x128xf32> to vector<1x128xf32>
    %9 = vector.shape_cast %8 : vector<1x128xf32> to vector<1x1x128xf32>
    %cst_4 = arith.constant 2.500000e-01 : f32
    %10 = vector.broadcast %cst_4 : f32 to vector<1x1x128xf32>
    %11 = arith.mulf %9, %10 : vector<1x1x128xf32>
    %cst_5 = arith.constant 9.99999997E-7 : f32
    %12 = vector.broadcast %cst_5 : f32 to vector<1x1x128xf32>
    %13 = arith.addf %11, %12 : vector<1x1x128xf32>
    %14 = math.rsqrt %13 : vector<1x1x128xf32>
    %c0_6 = arith.constant 0 : index
    %c0_7 = arith.constant 0 : index
    %15 = vector.load %arg3[%c0_6, %c0_7] : memref<4x2xf32, #tpu.memory_space<vmem>>, vector<4x1xf32>
    %c0_8 = arith.constant 0 : index
    %c1 = arith.constant 1 : index
    %16 = vector.load %arg3[%c0_8, %c1] : memref<4x2xf32, #tpu.memory_space<vmem>>, vector<4x1xf32>
    %17 = vector.broadcast %14 : vector<1x1x128xf32> to vector<1x4x128xf32>
    %18 = arith.mulf %6, %17 : vector<1x4x128xf32>
    %19 = vector.shape_cast %15 : vector<4x1xf32> to vector<1x4x1xf32>
    %20 = vector.broadcast %19 : vector<1x4x1xf32> to vector<1x4x128xf32>
    %21 = arith.mulf %18, %20 : vector<1x4x128xf32>
    %22 = vector.shape_cast %16 : vector<4x1xf32> to vector<1x4x1xf32>
    %23 = vector.broadcast %22 : vector<1x4x1xf32> to vector<1x4x128xf32>
    %24 = arith.addf %21, %23 : vector<1x4x128xf32>
    %c0_9 = arith.constant 0 : index
    %c0_10 = arith.constant 0 : index
    %c0_11 = arith.constant 0 : index
    %25 = vector.load %arg4[%c0_9, %c0_10, %c0_11] : memref<1x4x128xf32, #tpu.memory_space<vmem>>, vector<1x4x128xf32>
    tpu.vector_store %arg4[%c0_9, %c0_10, %c0_11], %24 {strides = array<i32>} : memref<1x4x128xf32, #tpu.memory_space<vmem>>, vector<1x4x128xf32>,
    return
  }
  func.func @transform_0(%arg0: i32, %arg1: i32) -> (i32, i32, i32) {
    %c0_i32 = arith.constant 0 : i32
    %c0_i32_0 = arith.constant 0 : i32
    return %arg0, %c0_i32, %arg1 : i32, i32, i32
  }
  func.func @transform_1(%arg0: i32, %arg1: i32) -> (i32, i32) {
    %c0_i32 = arith.constant 0 : i32
    %c0_i32_0 = arith.constant 0 : i32
    %c0_i32_1 = arith.constant 0 : i32
    return %c0_i32, %c0_i32_0 : i32, i32
  }
  func.func @transform_2(%arg0: i32, %arg1: i32) -> (i32, i32, i32) {
    %c0_i32 = arith.constant 0 : i32
    %c0_i32_0 = arith.constant 0 : i32
    return %arg0, %c0_i32, %arg1 : i32, i32, i32
  }
}

</mosaic_0001>

<llo_original>
// kernel: tpu_custom_call.1
$region0: #{tpu_custom_call.1}
  #allocation0 [shape = 'u32[]', space=smem, size = 0x4, offset = 0x4, fixed_abs, tag = 'smem constant byte address 0x4 - core index']
  #allocation1 [shape = 'u32[144,128]{1,0:T(1,128)}', space=vmem, size = 0x12000, scoped, tag = 'internal scratch']
  %s0 = inlined_call_operand.hbm [shape: f32[2,4,256], index: 0, kind: input, shape index: {}]
  %s1 = inlined_call_operand.vmem [shape: f32[4,2], index: 1, kind: input, shape index: {}]
  %s2 = inlined_call_operand.hbm [shape: f32[2,4,256], index: 2, kind: output, shape index: {}]
  %s3 = sld [smem:[#allocation0]]
  $region45: #{tpu_custom_call.1} parent=0
    _
  %s5 = ssub.s32 1, %s3
  %s6 = scalar_select 0, %s5, %s3
  $region1: #{tpu_custom_call.1} parent=0
    #allocation2 [shape = 'u8[4096]{0}', space=vmem, size = 0x1000, scoped, tag = 'input window, operand 0']
    #allocation3 [shape = 's32[2]{0}', space=sflag, size = 0x8, scoped, tag = 'scoped memory for tpu_custom_call.1']
    #allocation4 [shape = 's32[2]{0}', space=sflag, size = 0x8, scoped, tag = 'scoped memory for tpu_custom_call.1']
    #allocation5 [shape = 'u8[4096]{0}', space=vmem, size = 0x1000, scoped, tag = 'output window, operand 0']
    %7 = vsyncpa [#allocation3], 0
    %s8 = scalar_lea.sflag [#allocation3], 1
    %9 = vsyncpa %s8, 0
    %10 = vsyncpa [#allocation4], 0
    %s11 = scalar_lea.sflag [#allocation4], 1
    %12 = vsyncpa %s11, 0
    loop: start=0, step=1, limit=6
    $region2: #{tpu_custom_call.1} parent=1 // loop_pre_header
      _
    $region3: #{tpu_custom_call.1} parent=1 // loop_header
      %s14 = sphi 0, %s18
      %p15 = scmp.ge.s32.totalorder %s14, 6
      %s21 = sphi 0, %s33
      %s22 = sphi 0, %s29
      %s23 = sphi 0, %s21
      %s24 = sphi 0, %s22
      %s25 = sphi 0, %s23
      %s26 = sphi 0, %s24
      %s38 = sphi 0, %s40
      %s41 = sphi 0, %s38
      %s42 = sphi 0, %s41
      %s58 = sphi 0, %s42
      %s62 = sphi 0, %s62
      %s64 = sphi 0, %s62
      %s65 = sphi 0, %s64
      %s79 = sphi 0, %s65
      %s87 = sphi 0, %s89
      %s90 = sphi 0, %s87
      %s91 = sphi 0, %s90
      %s107 = sphi 0, %s91
    $region4: #{tpu_custom_call.1} parent=1 // loop_header_branch
      %17 = sbr.rel (%p15) target = $region8
    $region5: #{tpu_custom_call.1} parent=1 // loop_body
      %s19 = ssub.s32 %s14, 1
      %s20 = ssub.s32 %s14, 2
      %s27 = sadd.s32 1, %s22
      %p28 = scmp.ge.s32.totalorder %s27, 2
      %s29 = scalar_select %p28, 0, %s27
      %s30 = sadd.s32 1, %s21
      %s31 = scalar_select %p28, %s30, %s21
      %p32 = scmp.ge.s32.totalorder %s31, 2
      %s33 = scalar_select %p32, 0, %s31
      %s34 = ssub.s32 %s21, %s33
      %s35 = ssub.s32 %s22, %s29
      %s36 = sor.u32 %s34, %s35
      %p37 = scmp.eq.s32.totalorder %s36, 0
      %s39 = sadd.s32 %s38, 1
      %s40 = scalar_select %p37, %s38, %s39
      %p43 = pneg %p37
      %p44 = scmp.eq.s32.totalorder %s14, 3
      %p45 = por %p43, %p44
      %p46 = scmp.ne.s32.totalorder %s38, %s41
      %p47 = scmp.eq.s32.totalorder %s14, 0
      %p48 = por %p46, %p47
      %p49 = scmp.ne.s32.totalorder %s38, %s41
      %p50 = scmp.eq.s32.totalorder %s19, 3
      %p51 = por %p49, %p50
      %p52 = scmp.ne.s32.totalorder %s41, %s42
      %p53 = scmp.eq.s32.totalorder %s19, 0
      %p54 = por %p52, %p53
      %p55 = scmp.ne.s32.totalorder %s41, %s42
      %p56 = scmp.eq.s32.totalorder %s20, 3
      %p57 = por %p55, %p56
      %p59 = scmp.ne.s32.totalorder %s42, %s58
      %p60 = scmp.eq.s32.totalorder %s20, 0
      %p61 = por %p59, %p60
      %s63 = sadd.s32 %s62, 1
      %p66 = scmp.eq.s32.totalorder %s14, 3
      %p67 = scmp.ne.s32.totalorder %s62, %s64
      %p68 = scmp.eq.s32.totalorder %s14, 0
      %p69 = por %p67, %p68
      %p70 = scmp.ne.s32.totalorder %s62, %s64
      %p71 = scmp.eq.s32.totalorder %s19, 3
      %p72 = por %p70, %p71
      %p73 = scmp.ne.s32.totalorder %s64, %s65
      %p74 = scmp.eq.s32.totalorder %s19, 0
      %p75 = por %p73, %p74
      %p76 = scmp.ne.s32.totalorder %s64, %s65
      %p77 = scmp.eq.s32.totalorder %s20, 3
      %p78 = por %p76, %p77
      %p80 = scmp.ne.s32.totalorder %s65, %s79
      %p81 = scmp.eq.s32.totalorder %s20, 0
      %p82 = por %p80, %p81
      %s83 = ssub.s32 %s21, %s33
      %s84 = ssub.s32 %s22, %s29
      %s85 = sor.u32 %s83, %s84
      %p86 = scmp.eq.s32.totalorder %s85, 0
      %s88 = sadd.s32 %s87, 1
      %s89 = scalar_select %p86, %s87, %s88
      %p92 = pneg %p86
      %p93 = scmp.eq.s32.totalorder %s14, 3
      %p94 = por %p92, %p93
      %p95 = scmp.ne.s32.totalorder %s87, %s90
      %p96 = scmp.eq.s32.totalorder %s14, 0
      %p97 = por %p95, %p96
      %p98 = scmp.ne.s32.totalorder %s87, %s90
      %p99 = scmp.eq.s32.totalorder %s19, 3
      %p100 = por %p98, %p99
      %p101 = scmp.ne.s32.totalorder %s90, %s91
      %p102 = scmp.eq.s32.totalorder %s19, 0
      %p103 = por %p101, %p102
      %p104 = scmp.ne.s32.totalorder %s90, %s91
      %p105 = scmp.eq.s32.totalorder %s20, 3
      %p106 = por %p104, %p105
      %p108 = scmp.ne.s32.totalorder %s91, %s107
      %p109 = scmp.eq.s32.totalorder %s20, 0
      %p110 = por %p108, %p109
      %p111 = scmp.le.s32.totalorder 1, %s14
      %p112 = scmp.lt.s32.totalorder %s14, 5
      %p113 = pnand %p111, %p112
      %p114 = pneg %p113
      // Predicated region
      $region9: #{tpu_custom_call.1} parent=5 // pred_check
        _
      $region10: #{tpu_custom_call.1} parent=5 // pred_check_branch
        %116 = sbr.rel (%p113) target = $region12
      $region11: #{tpu_custom_call.1} parent=5 // pred_region
        %s117 = ssub.s32 %s14, 1
        // Predicated region
        $region13: #{tpu_custom_call.1} parent=11 // pred_check
          %p118 = pneg %p75
        $region14: #{tpu_custom_call.1} parent=11 // pred_check_branch
          %120 = sbr.rel (%p118) target = $region16
        $region15: #{tpu_custom_call.1} parent=11 // pred_region
          _
        $region16: #{tpu_custom_call.1} parent=11 // pred_fallthru
          _
      $region12: #{tpu_custom_call.1} parent=5 // pred_fallthru
        _
      %p121 = scmp.lt.s32.totalorder %s14, 4
      // Predicated region
      $region17: #{tpu_custom_call.1} parent=5 // pred_check
        %p122 = pneg %p121
      $region18: #{tpu_custom_call.1} parent=5 // pred_check_branch
        %124 = sbr.rel (%p122) target = $region20
      $region19: #{tpu_custom_call.1} parent=5 // pred_region
        // Predicated region
        $region21: #{tpu_custom_call.1} parent=19 // pred_check
          %p125 = pneg %p48
        $region22: #{tpu_custom_call.1} parent=19 // pred_check_branch
          %127 = sbr.rel (%p125) target = $region24
        $region23: #{tpu_custom_call.1} parent=19 // pred_region
          %s128 = sand.u32 %s38, 1
          %s129 = scalar_lea.sflag [#allocation3], %s128
          %s130 = sand.u32 %s38, 1
          %s131 = smul.addr %s130, 4
          %s132 = scalar_lea.vmem [#allocation2], %s131
          %s134 = ssub.s32 64, 64
          %135 = vsyncadd %s129, %s134
          %s136 = smul.addr %s21, 2
          %s137 = sadd.s32 %s22, %s136
          %s138 = smul.addr %s137, 64
          %s139 = scalar_lea.hbm %s0, %s138
          %s141 = sshll.u32 %s132, 4
          %s142 = int_to_ptr.vmem [resolvable:$true] %s141
          %144 = dma.hbm_to_vmem [thread:$0]  %s139, 64, %s142, %s129
        $region24: #{tpu_custom_call.1} parent=19 // pred_fallthru
          _
      $region20: #{tpu_custom_call.1} parent=5 // pred_fallthru
        _
      %p145 = scmp.le.s32.totalorder 1, %s14
      %p146 = scmp.lt.s32.totalorder %s14, 5
      %p147 = pnand %p145, %p146
      %p148 = pneg %p147
      // Predicated region
      $region25: #{tpu_custom_call.1} parent=5 // pred_check
        _
      $region26: #{tpu_custom_call.1} parent=5 // pred_check_branch
        %150 = sbr.rel (%p147) target = $region28
      $region27: #{tpu_custom_call.1} parent=5 // pred_region
        %s151 = ssub.s32 %s14, 1
        %s152 = sand.u32 %s41, 1
        %s153 = scalar_lea.sflag [#allocation3], %s152
        %s154 = sand.u32 %s41, 1
        %s155 = smul.addr %s154, 4
        %s156 = scalar_lea.vmem [#allocation2], %s155
        // Predicated region
        $region29: #{tpu_custom_call.1} parent=27 // pred_check
          %p157 = pneg %p54
        $region30: #{tpu_custom_call.1} parent=27 // pred_check_branch
          %159 = sbr.rel (%p157) target = $region32
        $region31: #{tpu_custom_call.1} parent=27 // pred_region
          %160 = dma.done %s153, 64
        $region32: #{tpu_custom_call.1} parent=27 // pred_fallthru
          _
        %s161 = sand.u32 %s41, 1
        %s162 = scalar_lea.sflag [#allocation3], %s161
        %s163 = sand.u32 %s41, 1
        %s164 = smul.addr %s163, 4
        %s165 = scalar_lea.vmem [#allocation2], %s164
        %p166 = pneg %p54
        %p167 = pneg %p51
        %p168 = pneg %p75
        %p169 = pneg %p72
        %p170 = pneg %p103
        %p171 = pneg %p100
        %s172 = sand.u32 %s90, 1
        %s173 = scalar_lea.sflag [#allocation4], %s172
        %s174 = sand.u32 %s90, 1
        %s175 = smul.addr %s174, 4
        %s176 = scalar_lea.vmem [#allocation5], %s175
        %v177 = vld [vmem:[%s156] sm:$0xf]
        %vm178 = vcmask 1043456
        %v179 = vsel %vm178, %v177, 0.0
        %v180 = vrot.slane %v179, 4
        %v181 = vadd.f32 %v179, %v180
        %v182 = vrot.slane %v181, 2
        %v183 = vadd.f32 %v181, %v182
        %v184 = vrot.slane %v183, 1
        %v185 = vadd.f32 %v183, %v184
        %v186 = vmul.f32 %v185, 0.25
        %v187 = vsub.f32 %v177, %v186
        %v188 = vmul.f32 %v187, %v187
        %v189 = vsel %vm178, %v188, 0.0
        %v190 = vrot.slane %v189, 4
        %v191 = vadd.f32 %v189, %v190
        %v192 = vrot.slane %v191, 2
        %v193 = vadd.f32 %v191, %v192
        %v194 = vrot.slane %v193, 1
        %v195 = vadd.f32 %v193, %v194
        %v196 = vmul.f32 %v195, 0.25
        %v197 = vadd.f32 %v196, 1e-06
        %v198 = vrsqrt.pop %v197
        %v199 = vld [vmem:[%s1] sm:$0xf]
        %v200 = vmul.f32 %v187, %v198
        %202 = vset.pattern.permute.xlu0 0
        %203 = vperm.xlu0 %202, %v199
        %v204 = vpop.permute.xlu0 %203
        %v206 = vmul.f32 %v200, %v204
        %207 = vset.pattern.permute.xlu0 1
        %208 = vperm.xlu0 %207, %v199
        %v209 = vpop.permute.xlu0 %208
        %v211 = vadd.f32 %v206, %v209
        %212 = vst [vmem:[%s176] sm:$0xf] %v211
        %s213 = sand.u32 %s90, 1
        %s214 = scalar_lea.sflag [#allocation4], %s213
        %s215 = sand.u32 %s90, 1
        %s216 = smul.addr %s215, 4
        %s217 = scalar_lea.vmem [#allocation5], %s216
        // Predicated region
        $region33: #{tpu_custom_call.1} parent=27 // pred_check
          %p218 = pneg %p100
        $region34: #{tpu_custom_call.1} parent=27 // pred_check_branch
          %220 = sbr.rel (%p218) target = $region36
        $region35: #{tpu_custom_call.1} parent=27 // pred_region
          %s222 = ssub.s32 64, 64
          %223 = vsyncadd %s214, %s222
          %s224 = smul.addr %s23, 2
          %s225 = sadd.s32 %s24, %s224
          %s226 = smul.addr %s225, 64
          %s227 = scalar_lea.hbm %s2, %s226
          %s229 = sshll.u32 %s217, 4
          %s230 = int_to_ptr.vmem [resolvable:$true] %s229
          %232 = dma.vmem_to_hbm [thread:$0]  %s230, 64, %s227, %s214
        $region36: #{tpu_custom_call.1} parent=27 // pred_fallthru
          _
      $region28: #{tpu_custom_call.1} parent=5 // pred_fallthru
        _
      %p233 = scmp.le.s32.totalorder 2, %s14
      // Predicated region
      $region37: #{tpu_custom_call.1} parent=5 // pred_check
        %p234 = pneg %p233
      $region38: #{tpu_custom_call.1} parent=5 // pred_check_branch
        %236 = sbr.rel (%p234) target = $region40
      $region39: #{tpu_custom_call.1} parent=5 // pred_region
        %s237 = ssub.s32 %s14, 2
        // Predicated region
        $region41: #{tpu_custom_call.1} parent=39 // pred_check
          %p238 = pneg %p106
        $region42: #{tpu_custom_call.1} parent=39 // pred_check_branch
          %240 = sbr.rel (%p238) target = $region44
        $region43: #{tpu_custom_call.1} parent=39 // pred_region
          %s241 = sand.u32 %s91, 1
          %s242 = scalar_lea.sflag [#allocation4], %s241
          %s243 = sand.u32 %s91, 1
          %s244 = smul.addr %s243, 4
          %s245 = scalar_lea.vmem [#allocation5], %s244
          %246 = dma.done %s242, 64
        $region44: #{tpu_custom_call.1} parent=39 // pred_fallthru
          _
      $region40: #{tpu_custom_call.1} parent=5 // pred_fallthru
        _
    $region6: #{tpu_custom_call.1} parent=1 // loop_footer
      %s18 = sadd.s32 1, %s14
    $region7: #{tpu_custom_call.1} parent=1 // loop_footer_branch
      %13 = sbr.rel target = $region3
    $region8: #{tpu_custom_call.1} parent=1 // loop_exit
      _
    %247 = vsyncpa [#allocation3], 1
    %s248 = scalar_lea.sflag [#allocation3], 1
    %249 = vsyncpa %s248, 1
    %250 = vsyncpa [#allocation4], 1
    %s251 = scalar_lea.sflag [#allocation4], 1
    %252 = vsyncpa %s251, 1

</llo_original>
